<compile_context>
chip_gen: v7x
topology: tpu7x:2x2x1
jax: 0.10.0
libtpu: 0.0.40
codegen_flags: <defaults>
</compile_context>

<pallas_src>
import functools
import math

import jax
import jax.numpy as jnp
from jax import lax
from jax.experimental import pallas as pl
from jax.experimental.pallas import tpu as pltpu


def _largest_divisor(n, limit, preferred=(8, 1)):
    """Largest divisor of n that is <= limit, preferring multiples of `preferred`."""
    limit = max(1, min(n, limit))
    divs = [d for d in range(1, limit + 1) if n % d == 0]
    for p in preferred:
        cand = [d for d in divs if d % p == 0]
        if cand:
            return max(cand)
    return max(divs)


def _simclr_loss_kernel(out1_hbm, out2_hbm, loss_ref,
                        xn_ref, stage_ref, diag_ref, acc_ref, copy_sem, *,
                        batch_size, tile_rows, tile_cols, norm_rows,
                        tiles_per_partial, temperature):
    """Row-tiled, column-chunked SimCLR NT-Xent loss.

    out1_hbm, out2_hbm : (B, D)   HBM refs (memory_space=pl.ANY, manual DMA)
    loss_ref           : (1,8,128) per-partial output block (lane-dense)
    xn_ref             : (2B, D)  VMEM scratch — normalized, temp-scaled embeddings
    stage_ref          : (NR, D)  VMEM staging for the init-time DMA + normalize
    diag_ref           : (TR, TC) VMEM int32 panel  diag_ref[p, j] = j - p
    acc_ref            : (1, 1)   VMEM running partial loss (per core)
    copy_sem           : (1,)     DMA semaphore for the init copies
    """
    n_total = 2 * batch_size
    num_chunks = n_total // tile_cols
    i0 = pl.program_id(0)          # partial / TensorCore index ("parallel")
    i1 = pl.program_id(1)          # row-tile index within the partial ("arbitrary")

    # ---- one-time setup per core: normalize both halves into resident xn -------
    @pl.when(i1 == 0)
    def _init():
        diag_ref[...] = (lax.broadcasted_iota(jnp.int32, (tile_rows, tile_cols), 1)
                         - lax.broadcasted_iota(jnp.int32, (tile_rows, tile_cols), 0))
        acc_ref[...] = jnp.zeros_like(acc_ref)
        # Fold 1/temperature into the normalization: (s*x_i)·(s*x_j) = (x_i·x_j)/temp.
        scale = jnp.float32(1.0 / math.sqrt(temperature))
        for half, src in enumerate((out1_hbm, out2_hbm)):
            for blk in range(batch_size // norm_rows):
                off = blk * norm_rows
                cp = pltpu.make_async_copy(src.at[pl.ds(off, norm_rows), :],
                                           stage_ref, copy_sem.at[0])
                cp.start()
                cp.wait()
                x = stage_ref[...].astype(jnp.float32)
                # F.normalize(p=2, dim=1): x / max(||x||, 1e-12)
                #   == x * rsqrt(max(||x||^2, 1e-24))   (rsqrt -> EUP, mul -> VPU)
                inv = lax.rsqrt(
                    jnp.maximum(jnp.sum(x * x, axis=1, keepdims=True),
                                jnp.float32(1e-24))) * scale
                xn_ref[pl.ds(half * batch_size + off, norm_rows), :] = (
                    (x * inv).astype(xn_ref.dtype))

    # ---- this grid step's row tile ----------------------------------------------
    tile_idx = i0 * tiles_per_partial + i1
    r0 = pl.multiple_of(tile_idx * tile_rows, tile_rows)
    rows = xn_ref[pl.ds(r0, tile_rows), :]                       # (TR, D)
    # Partner row of r is (r + B) mod 2B; tiles never straddle the out1/out2
    # boundary because tile_rows divides batch_size.
    pos_r0 = jnp.where(r0 < batch_size, r0 + batch_size, r0 - batch_size)

    # ---- online (flash-style) logsumexp over column chunks ----------------------
    def chunk_body(c, carry):
        m, l, pos = carry
        c0 = c * tile_cols
        if not isinstance(c0, int):
            c0 = pl.multiple_of(c0, tile_cols)
        cols = xn_ref[pl.ds(c0, tile_cols), :]                   # (TC, D)
        sim = lax.dot_general(rows, cols, (((1,), (1,)), ((), ())),
                              preferred_element_type=jnp.float32)  # (TR, TC) f32
        rel = diag_ref[...]                                      # j - p
        # Positive-pair similarity extracted from the panel (before the diag mask).
        pos_hit = rel == (pos_r0 - c0)
        pos = pos + jnp.sum(jnp.where(pos_hit, sim, jnp.float32(0.0)),
                            axis=1, keepdims=True)
        # masked_fill_(eye, -1e9), restricted to this (row-tile, col-chunk) block.
        sim = jnp.where(rel == (r0 - c0), jnp.float32(-1e9), sim)
        # Online LSE update (running max / running sum, f32).
        m_new = jnp.maximum(m, jnp.max(sim, axis=1, keepdims=True))
        l = l * jnp.exp(m - m_new) + jnp.sum(jnp.exp(sim - m_new),
                                             axis=1, keepdims=True)
        return m_new, l, pos

    carry = (jnp.full((tile_rows, 1), -jnp.inf, dtype=jnp.float32),
             jnp.zeros((tile_rows, 1), jnp.float32),
             jnp.zeros((tile_rows, 1), jnp.float32))
    if num_chunks <= 4:
        for c in range(num_chunks):       # tiny trip-count: unroll statically
            carry = chunk_body(c, carry)
    else:
        carry = lax.fori_loop(0, num_chunks, chunk_body, carry)
    m, l, pos = carry

    lse = m + jnp.log(l)                                         # (TR, 1)
    acc_ref[...] += jnp.sum(lse - pos, keepdims=True)            # (1, 1)

    # ---- finalize this core's partial --------------------------------------------
    @pl.when(i1 == tiles_per_partial - 1)
    def _finalize():
        loss_ref[...] = jnp.broadcast_to(acc_ref[...].reshape(1, 1, 1),
                                         loss_ref.shape)


def simclr_loss(out1, out2, temperature=0.1, *, mxu_dtype=jnp.bfloat16,
                row_tile=256, col_tile=512, norm_tile=1024):
    batch_size, dim = out1.shape
    assert out2.shape == (batch_size, dim)
    assert out1.dtype == out2.dtype
    n_total = 2 * batch_size

    # Sub-32-bit xn needs sublane-packing-aligned (multiple-of-16 for bf16) row
    # slices; if batch_size can't provide that, fall back to f32 storage.
    packing = 4 // jnp.dtype(mxu_dtype).itemsize
    if packing > 1 and batch_size % (8 * packing) != 0:
        mxu_dtype = jnp.float32
        packing = 1
    align = 8 * packing

    tile_rows = _largest_divisor(batch_size, row_tile, preferred=(align, 1))
    tile_cols = _largest_divisor(n_total, col_tile, preferred=(128, align, 1))
    norm_rows = _largest_divisor(batch_size, norm_tile, preferred=(align, 1))
    assert batch_size % tile_rows == 0 and n_total % tile_cols == 0
    assert batch_size % norm_rows == 0

    n_tiles = n_total // tile_rows                    # even (tile_rows | batch_size)
    num_partials = 2 if n_tiles % 2 == 0 else 1       # 2 -> use both v7x TCs
    tiles_per_partial = n_tiles // num_partials

    kernel = functools.partial(
        _simclr_loss_kernel,
        batch_size=batch_size, tile_rows=tile_rows, tile_cols=tile_cols,
        norm_rows=norm_rows, tiles_per_partial=tiles_per_partial,
        temperature=float(temperature))

    itemsize = jnp.dtype(mxu_dtype).itemsize
    in_itemsize = jnp.dtype(out1.dtype).itemsize
    est = (n_total * dim * itemsize                   # resident xn
           + norm_rows * dim * in_itemsize            # staging buffer
           + tile_rows * tile_cols * 4                # diag panel
           + 8 * tile_rows * tile_cols * 4            # sim / exp working set
           + 2 * tile_rows * dim * itemsize)          # row / col operands
    vmem_limit = int(min(100 * 1024 * 1024,
                         max(32 * 1024 * 1024, 2 * est + (8 << 20))))

    cost = pl.CostEstimate(
        flops=2 * n_total * n_total * dim,
        transcendentals=n_total * n_total,
        bytes_accessed=2 * batch_size * dim * in_itemsize
                       + num_partials * 8 * 128 * 4)

    partials = pl.pallas_call(
        kernel,
        grid=(num_partials, tiles_per_partial),
        in_specs=[pl.BlockSpec(memory_space=pl.ANY),   # out1 stays in HBM
                  pl.BlockSpec(memory_space=pl.ANY)],  # out2 stays in HBM
        out_specs=pl.BlockSpec((1, 8, 128), lambda i0, i1: (i0, 0, 0)),
        out_shape=jax.ShapeDtypeStruct((num_partials, 8, 128), jnp.float32),
        scratch_shapes=[
            pltpu.VMEM((n_total, dim), mxu_dtype),         # normalized embeddings
            pltpu.VMEM((norm_rows, dim), out1.dtype),      # init DMA staging
            pltpu.VMEM((tile_rows, tile_cols), jnp.int32),  # col - row panel
            pltpu.VMEM((1, 1), jnp.float32),               # per-core partial acc
            pltpu.SemaphoreType.DMA((1,)),                 # init DMA semaphore
        ],
        compiler_params=pltpu.CompilerParams(
            dimension_semantics=("parallel", "arbitrary"),
            vmem_limit_bytes=vmem_limit),
        cost_estimate=cost,
    )(out1, out2)

    # PyTorch: return loss / 2 * batch_size   (== (loss / 2) * batch_size)
    return jnp.sum(partials[:, 0, 0]) * jnp.float32(0.5 * batch_size)


def _simclr_loss_ref(out1, out2, temperature=0.1):
    """Pure-JAX reference (faithful to the PyTorch module)."""
    batch_size = out1.shape[0]
    total = jnp.concatenate([out1, out2], axis=0).astype(jnp.float32)
    norm = jnp.sqrt(jnp.sum(total * total, axis=1, keepdims=True))
    total = total / jnp.maximum(norm, 1e-12)
    sim = (total @ total.T) / temperature
    n = 2 * batch_size
    sim = jnp.where(jnp.eye(n, dtype=bool), -1e9, sim)
    log_prob = -jax.nn.log_softmax(sim, axis=1)
    idx = jnp.arange(batch_size)
    loss = jnp.sum(log_prob[idx, idx + batch_size] + log_prob[idx + batch_size, idx])
    return loss / 2 * batch_size


if __name__ == "__main__":
    # TODO(synk): the reference module's `print(log_prob.shape)` debug print is
    # intentionally dropped (log_prob is never materialized in the kernel).
    temperature = 0.1
    key = jax.random.PRNGKey(0)

    # --- small smoke test, exact-parity f32 MXU path -----------------------------
    batch_size, hidden = 8, 32
    k1, k2 = jax.random.split(key)
    out1 = jax.random.normal(k1, (batch_size, hidden), dtype=jnp.float32)
    out2 = jax.random.normal(k2, (batch_size, hidden), dtype=jnp.float32)
    ref = _simclr_loss_ref(out1, out2, temperature=temperature)
    loss_f32 = jax.block_until_ready(
        simclr_loss(out1, out2, temperature=temperature, mxu_dtype=jnp.float32))
    assert jnp.allclose(loss_f32, ref, rtol=1e-5, atol=1e-5), (loss_f32, ref)

    # --- default fast path (bf16 MXU operands, f32 softmax math) -----------------
    batch_size2, hidden2 = 16, 128
    k3, k4 = jax.random.split(jax.random.PRNGKey(1))
    a1 = jax.random.normal(k3, (batch_size2, hidden2), dtype=jnp.float32)
    a2 = jax.random.normal(k4, (batch_size2, hidden2), dtype=jnp.float32)
    ref2 = _simclr_loss_ref(a1, a2, temperature=temperature)
    loss_bf16 = jax.block_until_ready(
        simclr_loss(a1, a2, temperature=temperature))     # mxu_dtype=bf16 default
    assert jnp.allclose(loss_bf16, ref2, rtol=1e-1, atol=2.0), (loss_bf16, ref2)

    print("KERNEL_OK")
</pallas_src>

<mosaic_0001>
module attributes {stable_mosaic.version = 11 : i64} {
  func.func @_simclr_loss_kernel(%arg0: i32, %arg1: i32, %arg2: memref<8x32xf32, #tpu.memory_space<any>>, %arg3: memref<8x32xf32, #tpu.memory_space<any>>, %arg4: memref<1x8x128xf32, #tpu.memory_space<vmem>>, %arg5: memref<16x32xf32, #tpu.memory_space<vmem>>, %arg6: memref<8x32xf32, #tpu.memory_space<vmem>>, %arg7: memref<8x16xi32, #tpu.memory_space<vmem>>, %arg8: memref<1x1xf32, #tpu.memory_space<vmem>>, %arg9: memref<1x!tpu.dma_semaphore, #tpu.memory_space<semaphore_mem>>) attributes {dimension_semantics = [#tpu.dimension_semantics<parallel>, #tpu.dimension_semantics<arbitrary>], iteration_bounds = array<i64: 2, 1>, scalar_prefetch = 0 : i64, scratch_operands = 5 : i64, tpu.core_type = #tpu.core_type<tc>, window_params = [{}, {}, {transform_indices = @transform_2, window_bounds = array<i64: 1, 8, 128>}]} {
    %c0_i32 = arith.constant 0 : i32
    %0 = arith.cmpi eq, %arg1, %c0_i32 : i32
    %1 = arith.extui %0 : i1 to i32
    %c0_i32_0 = arith.constant 0 : i32
    %2 = arith.cmpi ne, %1, %c0_i32_0 : i32
    scf.if %2 {
      %58 = tpu.iota {dimensions = array<i32: 1>} : vector<8x16xi32>
      %59 = tpu.iota {dimensions = array<i32: 0>} : vector<8x16xi32>
      %60 = arith.subi %58, %59 : vector<8x16xi32>
      %c0_25 = arith.constant 0 : index
      %c0_26 = arith.constant 0 : index
      %61 = vector.load %arg7[%c0_25, %c0_26] : memref<8x16xi32, #tpu.memory_space<vmem>>, vector<8x16xi32>
      tpu.vector_store %arg7[%c0_25, %c0_26], %60 {strides = array<i32>} : memref<8x16xi32, #tpu.memory_space<vmem>>, vector<8x16xi32>,
      %cst_27 = arith.constant 0.000000e+00 : f32
      %62 = vector.broadcast %cst_27 : f32 to vector<1x1xf32>
      %c0_28 = arith.constant 0 : index
      %c0_29 = arith.constant 0 : index
      %63 = vector.load %arg8[%c0_28, %c0_29] : memref<1x1xf32, #tpu.memory_space<vmem>>, vector<1x1xf32>
      tpu.vector_store %arg8[%c0_28, %c0_29], %62 {strides = array<i32>} : memref<1x1xf32, #tpu.memory_space<vmem>>, vector<1x1xf32>,
      %c0_i32_30 = arith.constant 0 : i32
      %c0_i32_31 = arith.constant 0 : i32
      %c0_i32_32 = arith.constant 0 : i32
      %64 = tpu.memref_slice %arg2[%c0_i32_31, %c0_i32_32] : memref<8x32xf32, #tpu.memory_space<any>> -> memref<8x32xf32, #tpu.memory_space<any>>
      %65 = tpu.memref_slice %arg9[%c0_i32_30] : memref<1x!tpu.dma_semaphore, #tpu.memory_space<semaphore_mem>> -> memref<1x!tpu.dma_semaphore, #tpu.memory_space<semaphore_mem>>
      %66 = tpu.memref_squeeze %65 : memref<1x!tpu.dma_semaphore, #tpu.memory_space<semaphore_mem>> -> memref<!tpu.dma_semaphore, #tpu.memory_space<semaphore_mem>>
      tpu.enqueue_dma source(%64 : memref<8x32xf32, #tpu.memory_space<any>>) target(%arg6 : memref<8x32xf32, #tpu.memory_space<vmem>>) target_semaphore(%66 : memref<!tpu.dma_semaphore, #tpu.memory_space<semaphore_mem>>)
      %c0_i32_33 = arith.constant 0 : i32
      %c0_i32_34 = arith.constant 0 : i32
      %c0_i32_35 = arith.constant 0 : i32
      %67 = tpu.memref_slice %arg2[%c0_i32_34, %c0_i32_35] : memref<8x32xf32, #tpu.memory_space<any>> -> memref<8x32xf32, #tpu.memory_space<any>>
      %68 = tpu.memref_slice %arg9[%c0_i32_33] : memref<1x!tpu.dma_semaphore, #tpu.memory_space<semaphore_mem>> -> memref<1x!tpu.dma_semaphore, #tpu.memory_space<semaphore_mem>>
      %69 = tpu.memref_squeeze %68 : memref<1x!tpu.dma_semaphore, #tpu.memory_space<semaphore_mem>> -> memref<!tpu.dma_semaphore, #tpu.memory_space<semaphore_mem>>
      tpu.wait_dma2 semaphore(%69 : memref<!tpu.dma_semaphore, #tpu.memory_space<semaphore_mem>>) src(%67 : memref<8x32xf32, #tpu.memory_space<any>>) dst(%arg6 : memref<8x32xf32, #tpu.memory_space<vmem>>)
      %c0_36 = arith.constant 0 : index
      %c0_37 = arith.constant 0 : index
      %70 = vector.load %arg6[%c0_36, %c0_37] : memref<8x32xf32, #tpu.memory_space<vmem>>, vector<8x32xf32>
      %71 = arith.mulf %70, %70 : vector<8x32xf32>
      %cst_38 = arith.constant dense<0.000000e+00> : vector<8xf32>
      %72 = vector.multi_reduction <add>, %71, %cst_38 [1] : vector<8x32xf32> to vector<8xf32>
      %73 = vector.shape_cast %72 : vector<8xf32> to vector<8x1xf32>
      %cst_39 = arith.constant 1.000000e-24 : f32
      %74 = vector.broadcast %cst_39 : f32 to vector<8x1xf32>
      %75 = arith.maximumf %73, %74 : vector<8x1xf32>
      %76 = math.rsqrt %75 : vector<8x1xf32>
      %cst_40 = arith.constant 3.1622777 : f32
      %77 = vector.broadcast %cst_40 : f32 to vector<8x1xf32>
      %78 = arith.mulf %76, %77 : vector<8x1xf32>
      %79 = vector.broadcast %78 : vector<8x1xf32> to vector<8x32xf32>
      %80 = arith.mulf %70, %79 : vector<8x32xf32>
      %c0_41 = arith.constant 0 : index
      %c0_42 = arith.constant 0 : index
      %81 = vector.load %arg5[%c0_41, %c0_42] : memref<16x32xf32, #tpu.memory_space<vmem>>, vector<8x32xf32>
      tpu.vector_store %arg5[%c0_41, %c0_42], %80 {strides = array<i32>} : memref<16x32xf32, #tpu.memory_space<vmem>>, vector<8x32xf32>,
      %c0_i32_43 = arith.constant 0 : i32
      %c0_i32_44 = arith.constant 0 : i32
      %c0_i32_45 = arith.constant 0 : i32
      %82 = tpu.memref_slice %arg3[%c0_i32_44, %c0_i32_45] : memref<8x32xf32, #tpu.memory_space<any>> -> memref<8x32xf32, #tpu.memory_space<any>>
      %83 = tpu.memref_slice %arg9[%c0_i32_43] : memref<1x!tpu.dma_semaphore, #tpu.memory_space<semaphore_mem>> -> memref<1x!tpu.dma_semaphore, #tpu.memory_space<semaphore_mem>>
      %84 = tpu.memref_squeeze %83 : memref<1x!tpu.dma_semaphore, #tpu.memory_space<semaphore_mem>> -> memref<!tpu.dma_semaphore, #tpu.memory_space<semaphore_mem>>
      tpu.enqueue_dma source(%82 : memref<8x32xf32, #tpu.memory_space<any>>) target(%arg6 : memref<8x32xf32, #tpu.memory_space<vmem>>) target_semaphore(%84 : memref<!tpu.dma_semaphore, #tpu.memory_space<semaphore_mem>>)
      %c0_i32_46 = arith.constant 0 : i32
      %c0_i32_47 = arith.constant 0 : i32
      %c0_i32_48 = arith.constant 0 : i32
      %85 = tpu.memref_slice %arg3[%c0_i32_47, %c0_i32_48] : memref<8x32xf32, #tpu.memory_space<any>> -> memref<8x32xf32, #tpu.memory_space<any>>
      %86 = tpu.memref_slice %arg9[%c0_i32_46] : memref<1x!tpu.dma_semaphore, #tpu.memory_space<semaphore_mem>> -> memref<1x!tpu.dma_semaphore, #tpu.memory_space<semaphore_mem>>
      %87 = tpu.memref_squeeze %86 : memref<1x!tpu.dma_semaphore, #tpu.memory_space<semaphore_mem>> -> memref<!tpu.dma_semaphore, #tpu.memory_space<semaphore_mem>>
      tpu.wait_dma2 semaphore(%87 : memref<!tpu.dma_semaphore, #tpu.memory_space<semaphore_mem>>) src(%85 : memref<8x32xf32, #tpu.memory_space<any>>) dst(%arg6 : memref<8x32xf32, #tpu.memory_space<vmem>>)
      %c0_49 = arith.constant 0 : index
      %c0_50 = arith.constant 0 : index
      %88 = vector.load %arg6[%c0_49, %c0_50] : memref<8x32xf32, #tpu.memory_space<vmem>>, vector<8x32xf32>
      %89 = arith.mulf %88, %88 : vector<8x32xf32>
      %cst_51 = arith.constant dense<0.000000e+00> : vector<8xf32>
      %90 = vector.multi_reduction <add>, %89, %cst_51 [1] : vector<8x32xf32> to vector<8xf32>
      %91 = vector.shape_cast %90 : vector<8xf32> to vector<8x1xf32>
      %cst_52 = arith.constant 1.000000e-24 : f32
      %92 = vector.broadcast %cst_52 : f32 to vector<8x1xf32>
      %93 = arith.maximumf %91, %92 : vector<8x1xf32>
      %94 = math.rsqrt %93 : vector<8x1xf32>
      %cst_53 = arith.constant 3.1622777 : f32
      %95 = vector.broadcast %cst_53 : f32 to vector<8x1xf32>
      %96 = arith.mulf %94, %95 : vector<8x1xf32>
      %97 = vector.broadcast %96 : vector<8x1xf32> to vector<8x32xf32>
      %98 = arith.mulf %88, %97 : vector<8x32xf32>
      %c8 = arith.constant 8 : index
      %c0_54 = arith.constant 0 : index
      %99 = vector.load %arg5[%c8, %c0_54] : memref<16x32xf32, #tpu.memory_space<vmem>>, vector<8x32xf32>
      tpu.vector_store %arg5[%c8, %c0_54], %98 {strides = array<i32>} : memref<16x32xf32, #tpu.memory_space<vmem>>, vector<8x32xf32>,
    } else {
    }
    %c1_i32 = arith.constant 1 : i32
    %3 = arith.muli %arg0, %c1_i32 : i32
    %4 = arith.addi %3, %arg1 : i32
    %c8_i32 = arith.constant 8 : i32
    %5 = arith.muli %4, %c8_i32 : i32
    %6 = tpu.assume_multiple %5, 8 : i32
    %7 = arith.index_cast %6 : i32 to index
    %c0 = arith.constant 0 : index
    %8 = vector.load %arg5[%7, %c0] : memref<16x32xf32, #tpu.memory_space<vmem>>, vector<8x32xf32>
    %c8_i32_1 = arith.constant 8 : i32
    %9 = arith.cmpi slt, %6, %c8_i32_1 : i32
    %c8_i32_2 = arith.constant 8 : i32
    %10 = arith.addi %6, %c8_i32_2 : i32
    %c8_i32_3 = arith.constant 8 : i32
    %11 = arith.subi %6, %c8_i32_3 : i32
    %12 = arith.select %9, %10, %11 : i32
    %cst = arith.constant 0xFF800000 : f32
    %13 = vector.broadcast %cst : f32 to vector<8x1xf32>
    %cst_4 = arith.constant 0.000000e+00 : f32
    %14 = vector.broadcast %cst_4 : f32 to vector<8x1xf32>
    %cst_5 = arith.constant 0.000000e+00 : f32
    %15 = vector.broadcast %cst_5 : f32 to vector<8x1xf32>
    %c0_6 = arith.constant 0 : index
    %c0_7 = arith.constant 0 : index
    %16 = vector.load %arg5[%c0_6, %c0_7] : memref<16x32xf32, #tpu.memory_space<vmem>>, vector<16x32xf32>
    %cst_8 = arith.constant dense<0.000000e+00> : vector<8x16xf32>
    %17 = tpu.matmul %8, %16, %cst_8 {dimension_numbers = #tpu.dot_dimension_numbers<[1], [1], [0], [0], [0, 0, 1, 0], [], []>} : vector<8x32xf32>, vector<16x32xf32>, vector<8x16xf32> -> vector<8x16xf32>
    %c0_9 = arith.constant 0 : index
    %c0_10 = arith.constant 0 : index
    %18 = vector.load %arg7[%c0_9, %c0_10] : memref<8x16xi32, #tpu.memory_space<vmem>>, vector<8x16xi32>
    %c0_i32_11 = arith.constant 0 : i32
    %19 = arith.subi %12, %c0_i32_11 : i32
    %20 = vector.broadcast %19 : i32 to vector<8x16xi32>
    %21 = arith.cmpi eq, %18, %20 : vector<8x16xi32>
    %cst_12 = arith.constant 0.000000e+00 : f32
    %22 = vector.broadcast %cst_12 : f32 to vector<8x16xf32>
    %23 = arith.select %21, %17, %22 : vector<8x16xi1>, vector<8x16xf32>
    %cst_13 = arith.constant dense<0.000000e+00> : vector<8xf32>
    %24 = vector.multi_reduction <add>, %23, %cst_13 [1] : vector<8x16xf32> to vector<8xf32>
    %25 = vector.shape_cast %24 : vector<8xf32> to vector<8x1xf32>
    %26 = arith.addf %15, %25 : vector<8x1xf32>
    %c0_i32_14 = arith.constant 0 : i32
    %27 = arith.subi %6, %c0_i32_14 : i32
    %28 = vector.broadcast %27 : i32 to vector<8x16xi32>
    %29 = arith.cmpi eq, %18, %28 : vector<8x16xi32>
    %cst_15 = arith.constant -1.000000e+09 : f32
    %30 = vector.broadcast %cst_15 : f32 to vector<8x16xf32>
    %31 = arith.select %29, %30, %17 : vector<8x16xi1>, vector<8x16xf32>
    %cst_16 = arith.constant dense<0xFF800000> : vector<8xf32>
    %32 = vector.multi_reduction <maximumf>, %31, %cst_16 [1] : vector<8x16xf32> to vector<8xf32>
    %33 = vector.shape_cast %32 : vector<8xf32> to vector<8x1xf32>
    %34 = arith.maximumf %13, %33 : vector<8x1xf32>
    %35 = arith.subf %13, %34 : vector<8x1xf32>
    %36 = math.exp %35 : vector<8x1xf32>
    %37 = arith.mulf %14, %36 : vector<8x1xf32>
    %38 = vector.broadcast %34 : vector<8x1xf32> to vector<8x16xf32>
    %39 = arith.subf %31, %38 : vector<8x16xf32>
    %40 = math.exp %39 : vector<8x16xf32>
    %cst_17 = arith.constant dense<0.000000e+00> : vector<8xf32>
    %41 = vector.multi_reduction <add>, %40, %cst_17 [1] : vector<8x16xf32> to vector<8xf32>
    %42 = vector.shape_cast %41 : vector<8xf32> to vector<8x1xf32>
    %43 = arith.addf %37, %42 : vector<8x1xf32>
    %44 = math.log %43 : vector<8x1xf32>
    %45 = arith.addf %34, %44 : vector<8x1xf32>
    %c0_18 = arith.constant 0 : index
    %c0_19 = arith.constant 0 : index
    %46 = vector.load %arg8[%c0_18, %c0_19] : memref<1x1xf32, #tpu.memory_space<vmem>>, vector<1x1xf32>
    %47 = arith.subf %45, %26 : vector<8x1xf32>
    %48 = vector.shape_cast %47 : vector<8x1xf32> to vector<1x8x1xf32>
    %cst_20 = arith.constant dense<0.000000e+00> : vector<1xf32>
    %49 = vector.multi_reduction <add>, %48, %cst_20 [1, 2] : vector<1x8x1xf32> to vector<1xf32>
    %50 = vector.shape_cast %49 : vector<1xf32> to vector<1x1x1xf32>
    %51 = vector.extract %50[0, 0, 0] : f32 from vector<1x1x1xf32>
    %52 = vector.broadcast %51 : f32 to vector<1x1xf32>
    %53 = arith.addf %46, %52 : vector<1x1xf32>
    %c0_21 = arith.constant 0 : index
    %c0_22 = arith.constant 0 : index
    %54 = vector.load %arg8[%c0_21, %c0_22] : memref<1x1xf32, #tpu.memory_space<vmem>>, vector<1x1xf32>
    tpu.vector_store %arg8[%c0_21, %c0_22], %53 {strides = array<i32>} : memref<1x1xf32, #tpu.memory_space<vmem>>, vector<1x1xf32>,
    %c0_i32_23 = arith.constant 0 : i32
    %55 = arith.cmpi eq, %arg1, %c0_i32_23 : i32
    %56 = arith.extui %55 : i1 to i32
    %c0_i32_24 = arith.constant 0 : i32
    %57 = arith.cmpi ne, %56, %c0_i32_24 : i32
    scf.if %57 {
      %c0_25 = arith.constant 0 : index
      %c0_26 = arith.constant 0 : index
      %58 = vector.load %arg8[%c0_25, %c0_26] : memref<1x1xf32, #tpu.memory_space<vmem>>, vector<1x1xf32>
      %59 = vector.shape_cast %58 : vector<1x1xf32> to vector<1x1x1xf32>
      %60 = vector.shape_cast %59 : vector<1x1x1xf32> to vector<1x1x1xf32>
      %61 = vector.broadcast %60 : vector<1x1x1xf32> to vector<1x8x128xf32>
      %c0_27 = arith.constant 0 : index
      %c0_28 = arith.constant 0 : index
      %c0_29 = arith.constant 0 : index
      %62 = vector.load %arg4[%c0_27, %c0_28, %c0_29] : memref<1x8x128xf32, #tpu.memory_space<vmem>>, vector<1x8x128xf32>
      tpu.vector_store %arg4[%c0_27, %c0_28, %c0_29], %61 {strides = array<i32>} : memref<1x8x128xf32, #tpu.memory_space<vmem>>, vector<1x8x128xf32>,
    } else {
    }
    return
  }
  func.func @transform_2(%arg0: i32, %arg1: i32) -> (i32, i32, i32) {
    %c0_i32 = arith.constant 0 : i32
    %c0_i32_0 = arith.constant 0 : i32
    %c0_i32_1 = arith.constant 0 : i32
    return %arg0, %c0_i32, %c0_i32_0 : i32, i32, i32
  }
}

</mosaic_0001>

<llo_original>
// kernel: tpu_custom_call.1
$region0: #{tpu_custom_call.1}
  #allocation0 [shape = 'u32[]', space=smem, size = 0x4, offset = 0x4, fixed_abs, tag = 'smem constant byte address 0x4 - core index']
  #allocation1 [shape = 'u32[144,128]{1,0:T(1,128)}', space=vmem, size = 0x12000, scoped, tag = 'internal scratch']
  #allocation2 [shape = 'f32[16,32]{1,0:T(8,128)}', space=vmem, size = 0x2000, scoped, tag = 'scratch operand']
  #allocation3 [shape = 'f32[8,32]{1,0:T(8,128)}', space=vmem, size = 0x1000, scoped, tag = 'scratch operand']
  #allocation4 [shape = 's32[8,16]{1,0:T(8,128)}', space=vmem, size = 0x1000, scoped, tag = 'scratch operand']
  #allocation5 [shape = 'f32[1,1]{1,0:T(1,128)}', space=vmem, size = 0x200, scoped, tag = 'scratch operand']
  #allocation6 [shape = 's32[1]{0}', space=sflag, size = 0x4, scoped, tag = 'scratch operand']
  #allocation9 [shape = 's32[]', space=sflag, size = 0x4, offset = 0, fixed_abs, tag = 'sflag constant byte address 0x0 - dummy sync flag']
  #allocation10 [shape = 's32[]', space=sflag, size = 0x4, offset = 0, fixed_abs, tag = 'sflag constant byte address 0x0 - dummy sync flag']
  #allocation11 [shape = 'u32[]', space=smem, size = 0x4, offset = 0x44, fixed_abs, tag = 'smem constant byte address 0x44 - assertion arg 0']
  #allocation12 [shape = 'u32[]', space=smem, size = 0x4, offset = 0x48, fixed_abs, tag = 'smem constant byte address 0x48 - assertion arg 1']
  #allocation13 [shape = 's32[]', space=sflag, size = 0x4, offset = 0, fixed_abs, tag = 'sflag constant byte address 0x0 - dummy sync flag']
  #allocation14 [shape = 's32[]', space=sflag, size = 0x4, offset = 0, fixed_abs, tag = 'sflag constant byte address 0x0 - dummy sync flag']
  %s0 = inlined_call_operand.hbm [shape: f32[8,32], index: 0, kind: input, shape index: {}]
  %s1 = inlined_call_operand.hbm [shape: f32[8,32], index: 1, kind: input, shape index: {}]
  %s2 = inlined_call_operand.hbm [shape: f32[2,8,128], index: 2, kind: output, shape index: {}]
  %s3 = sld [smem:[#allocation0]]
  $region41: #{tpu_custom_call.1} parent=0
    _
  %s5 = ssub.s32 1, %s3
  %s6 = scalar_select 0, %s5, %s3
  $region1: #{tpu_custom_call.1} parent=0
    #allocation7 [shape = 'u8[8192]{0}', space=vmem, size = 0x2000, scoped, tag = 'output window, operand 0']
    #allocation8 [shape = 's32[2]{0}', space=sflag, size = 0x8, scoped, tag = 'scoped memory for tpu_custom_call.1']
    %7 = vsyncpa [#allocation8], 0
    %s8 = scalar_lea.sflag [#allocation8], 1
    %9 = vsyncpa %s8, 0
    loop: start=0, step=1, limit=3
    $region2: #{tpu_custom_call.1} parent=1 // loop_pre_header
      _
    $region3: #{tpu_custom_call.1} parent=1 // loop_header
      %s11 = sphi 0, %s15
      %p12 = scmp.ge.s32.totalorder %s11, 3
      %s17 = sphi 0, %s27
      %s18 = sphi 0, %s23
      %s19 = sphi 0, %s17
      %s20 = sphi 0, %s18
      %s30 = sphi 0, %s32
      %s33 = sphi 0, %s30
      %s43 = sphi 0, %s33
    $region4: #{tpu_custom_call.1} parent=1 // loop_header_branch
      %14 = sbr.rel (%p12) target = $region8
    $region5: #{tpu_custom_call.1} parent=1 // loop_body
      %s16 = ssub.s32 %s11, 1
      %s21 = sadd.s32 1, %s18
      %p22 = scmp.ge.s32.totalorder %s21, 1
      %s23 = scalar_select %p22, 0, %s21
      %s24 = sadd.s32 1, %s17
      %s25 = scalar_select %p22, %s24, %s17
      %p26 = scmp.ge.s32.totalorder %s25, 2
      %s27 = scalar_select %p26, 0, %s25
      %s28 = ssub.s32 %s17, %s27
      %p29 = scmp.eq.s32.totalorder %s28, 0
      %s31 = sadd.s32 %s30, 1
      %s32 = scalar_select %p29, %s30, %s31
      %p34 = pneg %p29
      %p35 = scmp.eq.s32.totalorder %s11, 1
      %p36 = por %p34, %p35
      %p37 = scmp.ne.s32.totalorder %s30, %s33
      %p38 = scmp.eq.s32.totalorder %s11, 0
      %p39 = por %p37, %p38
      %p40 = scmp.ne.s32.totalorder %s30, %s33
      %p41 = scmp.eq.s32.totalorder %s16, 1
      %p42 = por %p40, %p41
      %p44 = scmp.ne.s32.totalorder %s33, %s43
      %p45 = scmp.eq.s32.totalorder %s16, 0
      %p46 = por %p44, %p45
      %p47 = scmp.lt.s32.totalorder %s11, 2
      // Predicated region
      $region9: #{tpu_custom_call.1} parent=5 // pred_check
        %p48 = pneg %p47
      $region10: #{tpu_custom_call.1} parent=5 // pred_check_branch
        %50 = sbr.rel (%p48) target = $region12
      $region11: #{tpu_custom_call.1} parent=5 // pred_region
        %p51 = pneg %p39
        %p52 = pneg %p36
        %s53 = sand.u32 %s30, 1
        %s54 = scalar_lea.sflag [#allocation8], %s53
        %s55 = sand.u32 %s30, 1
        %s56 = smul.addr %s55, 8
        %s57 = scalar_lea.vmem [#allocation7], %s56
        %p58 = scmp.eq.s32.totalorder %s18, 0
        // Predicated region
        $region13: #{tpu_custom_call.1} parent=11 // pred_check
          %p59 = pneg %p58
        $region14: #{tpu_custom_call.1} parent=11 // pred_check_branch
          %61 = sbr.rel (%p59) target = $region16
        $region15: #{tpu_custom_call.1} parent=11 // pred_region
          %v62 = vlaneseq
          %v63 = vand.u32 %v62, 127
          %v64 = vlaneseq
          %v65 = vshrl.u32 %v64, 7
          %v66 = vsub.s32 %v63, %v65
          %vm67 = vcmask 130048
          %68 = vst.msk [vmem:[#allocation4] sm:$0xff] %vm67, %v66
          %vm69 = vcmask 0
          %70 = vst.msk [vmem:[#allocation5] sm:$0x1] %vm69, 0.0
          // Predicated region
          $region17: #{tpu_custom_call.1} parent=15 // pred_check
            _
          $region18: #{tpu_custom_call.1} parent=15 // pred_check_branch
            %72 = sbr.rel target = $region20
          $region19: #{tpu_custom_call.1} parent=15 // pred_region
            %73 = sst [smem:[#allocation11]] [#allocation10]
            %74 = sst [smem:[#allocation12]] [#allocation9]
          $region20: #{tpu_custom_call.1} parent=15 // pred_fallthru
            _
          %76 = shalt.err (0)
          %s78 = sshll.u32 [#allocation3], 4
          %s79 = int_to_ptr.vmem [resolvable:$true] %s78
          %81 = dma.hbm_to_vmem [thread:$0]  %s0, 128, %s79, [#allocation6]
          %s82 = smul.u32 8, 1
          %s83 = sshll.u32 %s82, 4
          %84 = dma.done [#allocation6], %s83
          %v85 = vld [vmem:[#allocation3] sm:$0xff]
          %v86 = vmul.f32 %v85, %v85
          %vm87 = vcmask 261120
          %v88 = vsel %vm87, %v86, 0.0
          %89 = vadd.xlane.f32.xlu0 %v88
          %v90 = vpop.xlane.xlu0 %89
          %v91 = vmax.f32 %v90, 1e-24
          %v92 = vrsqrt.pop %v91
          %v93 = vmul.f32 %v92, 3.1622777
          %v94 = vmul.f32 %v85, %v93
          %95 = vst.msk [vmem:[#allocation2] sm:$0xff] %vm87, %v94
          // Predicated region
          $region21: #{tpu_custom_call.1} parent=15 // pred_check
            _
          $region22: #{tpu_custom_call.1} parent=15 // pred_check_branch
            %97 = sbr.rel target = $region24
          $region23: #{tpu_custom_call.1} parent=15 // pred_region
            %98 = sst [smem:[#allocation11]] [#allocation14]
            %99 = sst [smem:[#allocation12]] [#allocation13]
          $region24: #{tpu_custom_call.1} parent=15 // pred_fallthru
            _
          %101 = shalt.err (0)
          %s103 = sshll.u32 [#allocation3], 4
          %s104 = int_to_ptr.vmem [resolvable:$true] %s103
          %106 = dma.hbm_to_vmem [thread:$0]  %s1, 128, %s104, [#allocation6]
          %s107 = sshll.u32 %s82, 4
          %108 = dma.done [#allocation6], %s107
          %v109 = vld [vmem:[#allocation3] sm:$0xff]
          %v110 = vmul.f32 %v109, %v109
          %v111 = vsel %vm87, %v110, 0.0
          %112 = vadd.xlane.f32.xlu0 %v111
          %v113 = vpop.xlane.xlu0 %112
          %v114 = vmax.f32 %v113, 1e-24
          %v115 = vrsqrt.pop %v114
          %v116 = vmul.f32 %v115, 3.1622777
          %v117 = vmul.f32 %v109, %v116
          %118 = vst.msk [vmem:[#allocation2 + $0x8] sm:$0xff] %vm87, %v117
        $region16: #{tpu_custom_call.1} parent=11 // pred_fallthru
          _
        %s119 = sadd.s32 %s17, %s18
        %s120 = smul.u32 %s119, 8
        %s121 = scalar_lea.vmem [#allocation2], %s120
        %v122 = vld [vmem:[%s121] sm:$0xff]
        %p123 = scmp.lt.s32.totalorder %s120, 8
        %s124 = sadd.s32 %s120, 8
        %s125 = ssub.s32 %s120, 8
        %s126 = scalar_select %p123, %s124, %s125
        %v127 = vld [vmem:[#allocation2] sm:$0xff]
        %v128 = vld [vmem:[#allocation2 + $0x8] sm:$0xff]
        %vm129 = vcmask 261120
        %v131 = vsel %vm129, %v122, 0
        %v134 = vsel %vm129, %v127, 0
        %v137 = vsel %vm129, %v128, 0
        %139 = vmatprep.subr.mxu0 0.0
        %140 = vmatpush1.xpose.msra.mxu0 %v134
        %141 = vmatprep.subr.mxu0 0.0
        %142 = vmatpush1.xpose.msra.mxu0 %v137
        %143 = vmatprep.subr.mxu0 0.0
        %144 = vmatpush1.xpose.msra.mxu0 0.0
        %145 = vmatprep.subr.mxu0 0.0
        %146 = vmatpush1.xpose.msra.mxu0 0.0
        %147 = vmatprep.subr.mxu0 0.0
        %148 = vmatpush1.xpose.msra.mxu0 0.0
        %149 = vmatprep.subr.mxu0 0.0
        %150 = vmatpush1.xpose.msra.mxu0 0.0
        %151 = vmatprep.subr.mxu0 0.0
        %152 = vmatpush1.xpose.msra.mxu0 0.0
        %153 = vmatprep.subr.mxu0 0.0
        %154 = vmatpush1.xpose.msra.mxu0 0.0
        %155 = vmatprep.subr.mxu0 0.0
        %156 = vmatpush1.xpose.msra.mxu0 0.0
        %157 = vmatprep.subr.mxu0 0.0
        %158 = vmatpush1.xpose.msra.mxu0 0.0
        %159 = vmatprep.subr.mxu0 0.0
        %160 = vmatpush1.xpose.msra.mxu0 0.0
        %161 = vmatprep.subr.mxu0 0.0
        %162 = vmatpush1.xpose.msra.mxu0 0.0
        %163 = vmatprep.subr.mxu0 0.0
        %164 = vmatpush1.xpose.msra.mxu0 0.0
        %165 = vmatprep.subr.mxu0 0.0
        %166 = vmatpush1.xpose.msra.mxu0 0.0
        %167 = vmatprep.subr.mxu0 0.0
        %168 = vmatpush1.xpose.msra.mxu0 0.0
        %169 = vmatprep.subr.mxu0 0.0
        %170 = vmatpush1.xpose.msra.mxu0 0.0
        %171 = vmatprep.subr.mxu0 0.0
        %172 = vmatpush1.xpose.msra.mxu0 0.0
        %173 = vmatprep.subr.mxu0 0.0
        %174 = vmatpush1.xpose.msra.mxu0 0.0
        %175 = vmatprep.subr.mxu0 0.0
        %176 = vmatpush1.xpose.msra.mxu0 0.0
        %177 = vmatprep.subr.mxu0 0.0
        %178 = vmatpush1.xpose.msra.mxu0 0.0
        %179 = vmatprep.subr.mxu0 0.0
        %180 = vmatpush1.xpose.msra.mxu0 0.0
        %181 = vmatprep.subr.mxu0 0.0
        %182 = vmatpush1.xpose.msra.mxu0 0.0
        %183 = vmatprep.subr.mxu0 0.0
        %184 = vmatpush1.xpose.msra.mxu0 0.0
        %185 = vmatprep.subr.mxu0 0.0
        %186 = vmatpush1.xpose.msra.mxu0 0.0
        %187 = vmatprep.subr.mxu0 0.0
        %188 = vmatpush1.xpose.msra.mxu0 0.0
        %189 = vmatprep.subr.mxu0 0.0
        %190 = vmatpush1.xpose.msra.mxu0 0.0
        %191 = vmatprep.subr.mxu0 0.0
        %192 = vmatpush1.xpose.msra.mxu0 0.0
        %193 = vmatprep.subr.mxu0 0.0
        %194 = vmatpush1.xpose.msra.mxu0 0.0
        %195 = vmatprep.subr.mxu0 0.0
        %196 = vmatpush1.xpose.msra.mxu0 0.0
        %197 = vmatprep.subr.mxu0 0.0
        %198 = vmatpush1.xpose.msra.mxu0 0.0
        %199 = vmatprep.subr.mxu0 0.0
        %200 = vmatpush1.xpose.msra.mxu0 0.0
        %201 = vmatprep.subr.mxu0 0.0
        %202 = vmatpush1.xpose.msra.mxu0 0.0
        %203 = vmatprep.mubr.f32.mxu0 0.0
        %204 = vmatmul.mubr.f32.gmra.mrb[0].mxu0 %v131
        %v205 = vpop.f32.mrb[0].mxu0
        %v206 = vadd.f32 0.0, %v205
        %v207 = vpop.f32.mrb[0].mxu0
        %208 = vdwg.mxu0
        %v209 = vld [vmem:[#allocation4] sm:$0xff]
        %v210 = vstv %s126
        %vm211 = vcmp.eq.s32.totalorder %v209, %v210
        %v212 = vsel %vm211, %v206, 0.0
        %vm213 = vcmask 130048
        %v214 = vsel %vm213, %v212, 0.0
        %215 = vadd.xlane.f32.xlu0 %v214
        %v216 = vpop.xlane.xlu0 %215
        %v217 = vadd.f32 %v216, 0.0
        %v218 = vstv %s120
        %vm219 = vcmp.eq.s32.totalorder %v209, %v218
        %v220 = vsel %vm219, -1e+09, %v206
        %v221 = vsel %vm213, %v220, -inf
        %222 = vmax.xlane.f32.xlu0 %v221
        %v223 = vpop.xlane.xlu0 %222
        %v224 = vsub.f32 -inf, %v223
        %v225 = vmul.f32 %v224, 1.442695
        %v226 = vpow.pop %v225
        %v227 = vmul.f32 %v226, 0.0
        %v228 = vsub.f32 %v220, %v223
        %v229 = vmul.f32 %v228, 1.442695
        %v230 = vpow.pop %v229
        %v231 = vsel %vm213, %v230, 0.0
        %232 = vadd.xlane.f32.xlu0 %v231
        %v233 = vpop.xlane.xlu0 %232
        %v234 = vadd.f32 %v227, %v233
        %v235 = vlog2.pop %v234
        %v236 = vmul.f32 %v235, 0.6931472
        %v237 = vadd.f32 %v223, %v236
        %v238 = vld [vmem:[#allocation5] sm:$0x1]
        %v239 = vsub.f32 %v237, %v217
        %vm240 = vcmask 7168
        %v241 = vsel %vm240, %v239, 0.0
        %242 = vadd.xlane.f32.xlu0 %v241
        %v243 = vpop.xlane.xlu0 %242
        %v244 = vrot.slane %v243, 4
        %v245 = vadd.f32 %v243, %v244
        %v246 = vrot.slane %v245, 2
        %v247 = vadd.f32 %v245, %v246
        %v248 = vrot.slane %v247, 1
        %v249 = vadd.f32 %v247, %v248
        %s250 = vtos %v249
        %v251 = vstv %s250
        %v252 = vadd.f32 %v238, %v251
        %vm253 = vcmask 0
        %254 = vst.msk [vmem:[#allocation5] sm:$0x1] %vm253, %v252
        // Predicated region
        $region25: #{tpu_custom_call.1} parent=11 // pred_check
          %p255 = pneg %p58
        $region26: #{tpu_custom_call.1} parent=11 // pred_check_branch
          %257 = sbr.rel (%p255) target = $region28
        $region27: #{tpu_custom_call.1} parent=11 // pred_region
          %v258 = vld [vmem:[#allocation5] sm:$0x1]
          %v260 = vlaneseq
          %v261 = vshrl.u32 %v260, 7
          %v262 = vsub.s32 0, %v261
          %v263 = vrot.slane %v258, %v262
          %264 = vset.pattern.permute.xlu0 0
          %265 = vperm.xlu0 %264, %v263
          %v266 = vpop.permute.xlu0 %265
          %268 = vst [vmem:[%s57] sm:$0xff] %v266
        $region28: #{tpu_custom_call.1} parent=11 // pred_fallthru
          _
        %s269 = sand.u32 %s30, 1
        %s270 = scalar_lea.sflag [#allocation8], %s269
        %s271 = sand.u32 %s30, 1
        %s272 = smul.addr %s271, 8
        %s273 = scalar_lea.vmem [#allocation7], %s272
        // Predicated region
        $region29: #{tpu_custom_call.1} parent=11 // pred_check
          %p274 = pneg %p36
        $region30: #{tpu_custom_call.1} parent=11 // pred_check_branch
          %276 = sbr.rel (%p274) target = $region32
        $region31: #{tpu_custom_call.1} parent=11 // pred_region
          %s278 = ssub.s32 128, 128
          %279 = vsyncadd %s270, %s278
          %s280 = smul.addr %s17, 128
          %s281 = scalar_lea.hbm %s2, %s280
          %s283 = sshll.u32 %s273, 4
          %s284 = int_to_ptr.vmem [resolvable:$true] %s283
          %286 = dma.vmem_to_hbm [thread:$0]  %s284, 128, %s281, %s270
        $region32: #{tpu_custom_call.1} parent=11 // pred_fallthru
          _
      $region12: #{tpu_custom_call.1} parent=5 // pred_fallthru
        _
      %p287 = scmp.le.s32.totalorder 1, %s11
      // Predicated region
      $region33: #{tpu_custom_call.1} parent=5 // pred_check
        %p288 = pneg %p287
      $region34: #{tpu_custom_call.1} parent=5 // pred_check_branch
        %290 = sbr.rel (%p288) target = $region36
      $region35: #{tpu_custom_call.1} parent=5 // pred_region
        %s291 = ssub.s32 %s11, 1
        // Predicated region
        $region37: #{tpu_custom_call.1} parent=35 // pred_check
          %p292 = pneg %p42
        $region38: #{tpu_custom_call.1} parent=35 // pred_check_branch
          %294 = sbr.rel (%p292) target = $region40
        $region39: #{tpu_custom_call.1} parent=35 // pred_region
          %s295 = sand.u32 %s33, 1
          %s296 = scalar_lea.sflag [#allocation8], %s295
          %s297 = sand.u32 %s33, 1
          %s298 = smul.addr %s297, 8
          %s299 = scalar_lea.vmem [#allocation7], %s298
          %300 = dma.done %s296, 128
        $region40: #{tpu_custom_call.1} parent=35 // pred_fallthru
          _
      $region36: #{tpu_custom_call.1} parent=5 // pred_fallthru
        _
    $region6: #{tpu_custom_call.1} parent=1 // loop_footer
      %s15 = sadd.s32 1, %s11
    $region7: #{tpu_custom_call.1} parent=1 // loop_footer_branch
      %10 = sbr.rel target = $region3
    $region8: #{tpu_custom_call.1} parent=1 // loop_exit
      _
    %301 = vsyncpa [#allocation8], 1
    %s302 = scalar_lea.sflag [#allocation8], 1
    %303 = vsyncpa %s302, 1
  %304 = vsyncmov [#allocation6]
  %s305 = vpop.sfrf %304
  %p306 = scmp.eq.s32.totalorder %s305, 0
  %p307 = pneg %p306
  %309 = shalt.err (%p307)

</llo_original>
